<compile_context>
chip_gen: v7x
topology: tpu7x:2x2x1
jax: 0.10.0
libtpu: 0.0.40
codegen_flags: <defaults>
</compile_context>

<pallas_src>
import jax
import jax.numpy as jnp
from jax.experimental import pallas as pl
from jax.experimental.pallas import tpu as pltpu

NEG_SLOPE = 0.3


def _default_elementwise_dtype():
    """bf16 VALUs exist on v6e/v7x; keep f32 elementwise math on v5e and older."""
    try:
        kind = jax.devices()[0].device_kind.lower()
    except Exception:
        return jnp.float32
    if ("v6" in kind) or ("7" in kind):
        return jnp.bfloat16
    return jnp.float32


def _make_gating_kernel(ew_dtype):
    def gating_kernel(scores_ref, a1_ref, w2_ref, a4_ref, out_ref):
        # scores: [8, TB] f32, rows = (s1, s2, ones, 0, 0, 0, 0, 0).
        sp = scores_ref[...]
        s1 = sp[0:1, :]
        s2 = sp[1:2, :]
        slope = jnp.asarray(NEG_SLOPE, ew_dtype)

        # fc1 (+ b1 folded in via the ones row) on the MXU: [H,8] @ [8,TB].
        # a1 columns 3..7 hit the zero score rows, so they contribute nothing.
        h1 = jnp.dot(a1_ref[...].astype(jnp.bfloat16), sp.astype(jnp.bfloat16),
                     preferred_element_type=jnp.float32)            # [H, TB] f32
        h1 = h1.astype(ew_dtype)
        h1 = jnp.maximum(h1, slope * h1)                            # LeakyReLU(0.3)

        # fc2 on the MXU: [H,H] @ [H,TB], bf16 operands, f32 accumulate.
        h2 = jnp.dot(w2_ref[...], h1.astype(jnp.bfloat16),
                     preferred_element_type=jnp.float32).astype(ew_dtype)
        h2 = h2 + a1_ref[:, 3:4].astype(ew_dtype)                   # + b2
        h2 = jnp.maximum(h2, slope * h2)                            # LeakyReLU(0.3)

        # fc4 (H -> 1) on the MXU via an 8-row zero-padded weight; row 0 is real.
        logit8 = jnp.dot(a4_ref[...], h2.astype(jnp.bfloat16),
                         preferred_element_type=jnp.float32)        # [8, TB] f32
        logit = logit8[0:1, :] + a1_ref[0:1, 5:6]                   # + b4 -> [1, TB]

        # Sigmoid gate on the EUP (exp + approx reciprocal), final mix in f32.
        g = pl.reciprocal(1.0 + jnp.exp(-logit), approx=True)       # [1, TB]
        out_ref[...] = (g * s1 + (1.0 - g) * s2).astype(out_ref.dtype)

    return gating_kernel


def gating_forward(score1, score2, params, *, tb=2048, ew_dtype=None):
    """score1, score2: [B, 1] (or [B]) f32.
    params = (a1 f32[H,8], w2 bf16[H,H] (torch [out,in]), a4 bf16[8,H])."""
    a1, w2, a4 = params
    H = w2.shape[0]
    B = score1.shape[0]
    if ew_dtype is None:
        ew_dtype = _default_elementwise_dtype()

    # Lane-dense padded score slab: rows (s1, s2, ones, zeros x5).
    s1 = score1.reshape(1, B).astype(jnp.float32)
    s2 = score2.reshape(1, B).astype(jnp.float32)
    scores = jnp.concatenate(
        [s1, s2, jnp.ones((1, B), jnp.float32), jnp.zeros((5, B), jnp.float32)],
        axis=0)                                                     # [8, B]

    if B <= tb:
        TB = B                      # single grid step: block equals full extent
    else:
        assert tb % 128 == 0, "batch tile must be a multiple of 128"
        TB = tb
    grid = (pl.cdiv(B, TB),)

    cost = pl.CostEstimate(
        flops=2 * B * H * (H + 16),
        transcendentals=B,
        bytes_accessed=scores.size * 4 + B * 4 + a1.size * 4 + w2.size * 2 + a4.size * 2,
    )

    out = pl.pallas_call(
        _make_gating_kernel(ew_dtype),
        out_shape=jax.ShapeDtypeStruct((1, B), jnp.float32),
        grid=grid,
        in_specs=[
            pl.BlockSpec((8, TB), lambda i: (0, i)),   # scores: streamed, lane-dense
            pl.BlockSpec((H, 8), lambda i: (0, 0)),    # packed fc1/b1/b2/b4 slab: resident
            pl.BlockSpec((H, H), lambda i: (0, 0)),    # fc2 weight (bf16): resident
            pl.BlockSpec((8, H), lambda i: (0, 0)),    # fc4 weight rows (bf16): resident
        ],
        out_specs=pl.BlockSpec((1, TB), lambda i: (0, i)),
        compiler_params=pltpu.CompilerParams(
            dimension_semantics=("parallel",),
        ),
        cost_estimate=cost,
    )(scores, a1, w2, a4)

    return out.reshape(B, 1)


def init_params(key, input_size=2, hidden_size=256):
    """nn.Linear-style init (uniform +/- 1/sqrt(fan_in)), repacked into the kernel
    layout: a1 f32[H,8] (cols: w1a, w1b, b1, b2, 0, b4@row0, 0, 0),
    w2 bf16[H,H] in torch [out,in] orientation, a4 bf16[8,H] (row 0 = fc4 weight)."""
    H = hidden_size
    ks = jax.random.split(key, 6)

    def unif(k, shape, fan_in):
        bound = 1.0 / jnp.sqrt(jnp.float32(fan_in))
        return jax.random.uniform(k, shape, jnp.float32, -bound, bound)

    w1 = unif(ks[0], (H, input_size), input_size)     # torch fc1.weight [H, 2]
    b1 = unif(ks[1], (H,), input_size)
    w2 = unif(ks[2], (H, H), H)                       # torch fc2.weight [out, in]
    b2 = unif(ks[3], (H,), H)
    w4 = unif(ks[4], (1, H), H)                       # torch fc4.weight [1, H]
    b4 = unif(ks[5], (1,), H)

    a1 = jnp.zeros((H, 8), jnp.float32)
    a1 = a1.at[:, 0].set(w1[:, 0])
    a1 = a1.at[:, 1].set(w1[:, 1])
    a1 = a1.at[:, 2].set(b1)
    a1 = a1.at[:, 3].set(b2)
    a1 = a1.at[0, 5].set(b4[0])

    a4 = jnp.zeros((8, H), jnp.float32).at[0, :].set(w4[0, :]).astype(jnp.bfloat16)
    return a1, w2.astype(jnp.bfloat16), a4


def reference_forward(score1, score2, params, ew_dtype=jnp.float32):
    """Pure-JAX reference of the PyTorch forward (eval mode), same mixed-precision path."""
    a1, w2, a4 = params
    w1_bf = a1[:, 0:2].astype(jnp.bfloat16)                       # [H, 2]
    b1 = a1[:, 2].astype(jnp.bfloat16).astype(jnp.float32)        # kernel folds bf16 b1
    b2 = a1[:, 3]
    b4 = a1[0, 5]

    def leaky(v):
        return jnp.maximum(v, jnp.asarray(NEG_SLOPE, v.dtype) * v)

    s1 = score1.reshape(-1, 1).astype(jnp.float32)
    s2 = score2.reshape(-1, 1).astype(jnp.float32)
    x = jnp.concatenate([s1, s2], axis=1).astype(jnp.bfloat16)    # [B, 2]

    h1 = jnp.dot(x, w1_bf.T, preferred_element_type=jnp.float32) + b1[None, :]
    h1 = leaky(h1.astype(ew_dtype))
    h2 = jnp.dot(h1.astype(jnp.bfloat16), w2.T,
                 preferred_element_type=jnp.float32).astype(ew_dtype)
    h2 = leaky(h2 + b2[None, :].astype(ew_dtype))
    logit = jnp.dot(h2.astype(jnp.bfloat16), a4[0, :],
                    preferred_element_type=jnp.float32) + b4       # [B]
    g = jax.nn.sigmoid(logit)[:, None]                             # [B, 1]
    return g * s1 + (1.0 - g) * s2


if __name__ == "__main__":
    key = jax.random.PRNGKey(0)
    k1, k2, kp = jax.random.split(key, 3)

    H = 256
    params = init_params(kp, input_size=2, hidden_size=H)
    ew = _default_elementwise_dtype()

    # Small shape (single grid step, block == full extent).
    B = 8
    sc1 = jax.random.normal(k1, (B, 1), jnp.float32)
    sc2 = jax.random.normal(k2, (B, 1), jnp.float32)
    out = gating_forward(sc1, sc2, params, ew_dtype=ew)
    jax.block_until_ready(out)
    ref = reference_forward(sc1, sc2, params, ew_dtype=ew)
    assert out.shape == (B, 1)
    assert jnp.allclose(out, ref, atol=2e-2, rtol=2e-2), "mismatch vs reference (B=8)"

    # Multi-step grid, divisible batch (TB=2048, grid=2).
    B2 = 4096
    s1b = jax.random.normal(jax.random.PRNGKey(1), (B2, 1), jnp.float32)
    s2b = jax.random.normal(jax.random.PRNGKey(2), (B2, 1), jnp.float32)
    out2 = gating_forward(s1b, s2b, params, ew_dtype=ew)
    jax.block_until_ready(out2)
    ref2 = reference_forward(s1b, s2b, params, ew_dtype=ew)
    assert out2.shape == (B2, 1)
    assert jnp.allclose(out2, ref2, atol=2e-2, rtol=2e-2), "mismatch vs reference (B=4096)"

    # Ragged last tile (B % TB != 0): padded lanes compute on garbage but are
    # never written back; the valid region must still match.
    B3 = 1000
    s1c = jax.random.normal(jax.random.PRNGKey(3), (B3, 1), jnp.float32)
    s2c = jax.random.normal(jax.random.PRNGKey(4), (B3, 1), jnp.float32)
    out3 = gating_forward(s1c, s2c, params, tb=512, ew_dtype=ew)   # grid=2, ragged
    jax.block_until_ready(out3)
    ref3 = reference_forward(s1c, s2c, params, ew_dtype=ew)
    assert out3.shape == (B3, 1)
    assert jnp.allclose(out3, ref3, atol=2e-2, rtol=2e-2), "mismatch vs reference (B=1000)"

    print("KERNEL_OK")
</pallas_src>

<mosaic_0001>
module attributes {stable_mosaic.version = 11 : i64} {
  func.func @gating_kernel(%arg0: i32, %arg1: memref<8x8xf32, #tpu.memory_space<vmem>>, %arg2: memref<256x8xf32, #tpu.memory_space<vmem>>, %arg3: memref<256x256xbf16, #tpu.memory_space<vmem>>, %arg4: memref<8x256xbf16, #tpu.memory_space<vmem>>, %arg5: memref<1x8xf32, #tpu.memory_space<vmem>>) attributes {dimension_semantics = [#tpu.dimension_semantics<parallel>], iteration_bounds = array<i64: 1>, scalar_prefetch = 0 : i64, scratch_operands = 0 : i64, tpu.core_type = #tpu.core_type<tc>, window_params = [{transform_indices = @transform_0, window_bounds = array<i64: 8, 8>}, {pipeline_mode = #tpu.pipeline_mode<synchronous>, transform_indices = @transform_1, window_bounds = array<i64: 256, 8>}, {pipeline_mode = #tpu.pipeline_mode<synchronous>, transform_indices = @transform_2, window_bounds = array<i64: 256, 256>}, {pipeline_mode = #tpu.pipeline_mode<synchronous>, transform_indices = @transform_3, window_bounds = array<i64: 8, 256>}, {transform_indices = @transform_4, window_bounds = array<i64: 1, 8>}]} {
    %c0 = arith.constant 0 : index
    %c0_0 = arith.constant 0 : index
    %0 = vector.load %arg1[%c0, %c0_0] : memref<8x8xf32, #tpu.memory_space<vmem>>, vector<8x8xf32>
    %1 = vector.extract_strided_slice %0 {offsets = [0, 0], sizes = [1, 8], strides = [1, 1]} : vector<8x8xf32> to vector<1x8xf32>
    %2 = vector.extract_strided_slice %0 {offsets = [1, 0], sizes = [1, 8], strides = [1, 1]} : vector<8x8xf32> to vector<1x8xf32>
    %c0_1 = arith.constant 0 : index
    %c0_2 = arith.constant 0 : index
    %3 = vector.load %arg2[%c0_1, %c0_2] : memref<256x8xf32, #tpu.memory_space<vmem>>, vector<256x8xf32>
    %4 = arith.truncf %3 : vector<256x8xf32> to vector<256x8xbf16>
    %5 = arith.truncf %0 : vector<8x8xf32> to vector<8x8xbf16>
    %cst = arith.constant dense<0.000000e+00> : vector<256x8xf32>
    %6 = tpu.matmul %4, %5, %cst {dimension_numbers = #tpu.dot_dimension_numbers<[1], [0], [0], [1], [0, 0, 1, 1], [], []>} : vector<256x8xbf16>, vector<8x8xbf16>, vector<256x8xf32> -> vector<256x8xf32>
    %cst_3 = arith.constant 3.000000e-01 : f32
    %7 = vector.broadcast %cst_3 : f32 to vector<256x8xf32>
    %8 = arith.mulf %7, %6 : vector<256x8xf32>
    %9 = arith.maximumf %6, %8 : vector<256x8xf32>
    %c0_4 = arith.constant 0 : index
    %c0_5 = arith.constant 0 : index
    %10 = vector.load %arg3[%c0_4, %c0_5] : memref<256x256xbf16, #tpu.memory_space<vmem>>, vector<256x256xbf16>
    %11 = arith.truncf %9 : vector<256x8xf32> to vector<256x8xbf16>
    %cst_6 = arith.constant dense<0.000000e+00> : vector<256x8xf32>
    %12 = tpu.matmul %10, %11, %cst_6 {dimension_numbers = #tpu.dot_dimension_numbers<[1], [0], [0], [1], [0, 0, 1, 1], [], []>} : vector<256x256xbf16>, vector<256x8xbf16>, vector<256x8xf32> -> vector<256x8xf32>
    %c0_7 = arith.constant 0 : index
    %c3 = arith.constant 3 : index
    %13 = vector.load %arg2[%c0_7, %c3] : memref<256x8xf32, #tpu.memory_space<vmem>>, vector<256x1xf32>
    %14 = vector.broadcast %13 : vector<256x1xf32> to vector<256x8xf32>
    %15 = arith.addf %12, %14 : vector<256x8xf32>
    %cst_8 = arith.constant 3.000000e-01 : f32
    %16 = vector.broadcast %cst_8 : f32 to vector<256x8xf32>
    %17 = arith.mulf %16, %15 : vector<256x8xf32>
    %18 = arith.maximumf %15, %17 : vector<256x8xf32>
    %c0_9 = arith.constant 0 : index
    %c0_10 = arith.constant 0 : index
    %19 = vector.load %arg4[%c0_9, %c0_10] : memref<8x256xbf16, #tpu.memory_space<vmem>>, vector<8x256xbf16>
    %20 = arith.truncf %18 : vector<256x8xf32> to vector<256x8xbf16>
    %cst_11 = arith.constant dense<0.000000e+00> : vector<8x8xf32>
    %21 = tpu.matmul %19, %20, %cst_11 {dimension_numbers = #tpu.dot_dimension_numbers<[1], [0], [0], [1], [0, 0, 1, 1], [], []>} : vector<8x256xbf16>, vector<256x8xbf16>, vector<8x8xf32> -> vector<8x8xf32>
    %22 = vector.extract_strided_slice %21 {offsets = [0, 0], sizes = [1, 8], strides = [1, 1]} : vector<8x8xf32> to vector<1x8xf32>
    %c0_12 = arith.constant 0 : index
    %c5 = arith.constant 5 : index
    %23 = vector.load %arg2[%c0_12, %c5] : memref<256x8xf32, #tpu.memory_space<vmem>>, vector<1x1xf32>
    %24 = vector.broadcast %23 : vector<1x1xf32> to vector<1x8xf32>
    %25 = arith.addf %22, %24 : vector<1x8xf32>
    %cst_13 = arith.constant 0.000000e+00 : f32
    %26 = vector.broadcast %cst_13 : f32 to vector<1x8xf32>
    %27 = arith.subf %26, %25 : vector<1x8xf32>
    %28 = math.exp %27 : vector<1x8xf32>
    %cst_14 = arith.constant 1.000000e+00 : f32
    %29 = vector.broadcast %cst_14 : f32 to vector<1x8xf32>
    %30 = arith.addf %29, %28 : vector<1x8xf32>
    %31 = tpu.reciprocal %30 {approx = true} : vector<1x8xf32> -> vector<1x8xf32>
    %32 = arith.mulf %31, %1 : vector<1x8xf32>
    %cst_15 = arith.constant 1.000000e+00 : f32
    %33 = vector.broadcast %cst_15 : f32 to vector<1x8xf32>
    %34 = arith.subf %33, %31 : vector<1x8xf32>
    %35 = arith.mulf %34, %2 : vector<1x8xf32>
    %36 = arith.addf %32, %35 : vector<1x8xf32>
    %c0_16 = arith.constant 0 : index
    %c0_17 = arith.constant 0 : index
    %37 = vector.load %arg5[%c0_16, %c0_17] : memref<1x8xf32, #tpu.memory_space<vmem>>, vector<1x8xf32>
    tpu.vector_store %arg5[%c0_16, %c0_17], %36 {strides = array<i32>} : memref<1x8xf32, #tpu.memory_space<vmem>>, vector<1x8xf32>,
    return
  }
  func.func @transform_0(%arg0: i32) -> (i32, i32) {
    %c0_i32 = arith.constant 0 : i32
    %c0_i32_0 = arith.constant 0 : i32
    return %c0_i32, %arg0 : i32, i32
  }
  func.func @transform_1(%arg0: i32) -> (i32, i32) {
    %c0_i32 = arith.constant 0 : i32
    %c0_i32_0 = arith.constant 0 : i32
    %c0_i32_1 = arith.constant 0 : i32
    return %c0_i32, %c0_i32_0 : i32, i32
  }
  func.func @transform_2(%arg0: i32) -> (i32, i32) {
    %c0_i32 = arith.constant 0 : i32
    %c0_i32_0 = arith.constant 0 : i32
    %c0_i32_1 = arith.constant 0 : i32
    return %c0_i32, %c0_i32_0 : i32, i32
  }
  func.func @transform_3(%arg0: i32) -> (i32, i32) {
    %c0_i32 = arith.constant 0 : i32
    %c0_i32_0 = arith.constant 0 : i32
    %c0_i32_1 = arith.constant 0 : i32
    return %c0_i32, %c0_i32_0 : i32, i32
  }
  func.func @transform_4(%arg0: i32) -> (i32, i32) {
    %c0_i32 = arith.constant 0 : i32
    %c0_i32_0 = arith.constant 0 : i32
    return %c0_i32, %arg0 : i32, i32
  }
}

</mosaic_0001>

<llo_original>
// kernel: tpu_custom_call.1
$region0: #{tpu_custom_call.1}
  #allocation0 [shape = 'u32[]', space=smem, size = 0x4, offset = 0x4, fixed_abs, tag = 'smem constant byte address 0x4 - core index']
  #allocation1 [shape = 'u32[144,128]{1,0:T(1,128)}', space=vmem, size = 0x12000, scoped, tag = 'internal scratch']
  %s0 = inlined_call_operand.vmem [shape: f32[8,8], index: 0, kind: input, shape index: {}]
  %s1 = inlined_call_operand.vmem [shape: f32[256,8], index: 1, kind: input, shape index: {}]
  %s2 = inlined_call_operand.vmem [shape: bf16[256,256], index: 2, kind: input, shape index: {}]
  %s3 = inlined_call_operand.vmem [shape: bf16[8,256], index: 3, kind: input, shape index: {}]
  %s4 = inlined_call_operand.hbm [shape: f32[1,8], index: 4, kind: output, shape index: {}]
  %s5 = sld [smem:[#allocation0]]
  $region26: #{tpu_custom_call.1} parent=0
    _
  %s7 = ssub.s32 1, %s5
  %s8 = scalar_select 0, %s7, %s5
  $region1: #{tpu_custom_call.1} parent=0
    #allocation2 [shape = 'u8[512]{0}', space=vmem, size = 0x400, scoped, tag = 'output window, operand 0, single buffered']
    #allocation3 [shape = 's32[1]{0}', space=sflag, size = 0x4, scoped, tag = 'scoped memory for tpu_custom_call.1']
    %9 = vsyncpa [#allocation3], 0
    // Predicated region
    $region2: #{tpu_custom_call.1} parent=1 // pred_check
      _
    $region3: #{tpu_custom_call.1} parent=1 // pred_check_branch
      %11 = sbr.rel (0) target = $region5
    $region4: #{tpu_custom_call.1} parent=1 // pred_region
      _
    $region5: #{tpu_custom_call.1} parent=1 // pred_fallthru
      _
    // Predicated region
    $region6: #{tpu_custom_call.1} parent=1 // pred_check
      _
    $region7: #{tpu_custom_call.1} parent=1 // pred_check_branch
      %13 = sbr.rel (0) target = $region9
    $region8: #{tpu_custom_call.1} parent=1 // pred_region
      _
    $region9: #{tpu_custom_call.1} parent=1 // pred_fallthru
      _
    // Predicated region
    $region10: #{tpu_custom_call.1} parent=1 // pred_check
      _
    $region11: #{tpu_custom_call.1} parent=1 // pred_check_branch
      %15 = sbr.rel (0) target = $region13
    $region12: #{tpu_custom_call.1} parent=1 // pred_region
      _
    $region13: #{tpu_custom_call.1} parent=1 // pred_fallthru
      _
    // Predicated region
    $region14: #{tpu_custom_call.1} parent=1 // pred_check
      _
    $region15: #{tpu_custom_call.1} parent=1 // pred_check_branch
      %17 = sbr.rel (0) target = $region17
    $region16: #{tpu_custom_call.1} parent=1 // pred_region
      _
    $region17: #{tpu_custom_call.1} parent=1 // pred_fallthru
      _
    %v19 = vld [vmem:[%s0] sm:$0xff]
    %v20 = vld [vmem:[%s1] sm:$0xff]
    %v21 = vld [vmem:[%s1 + $0x8] sm:$0xff]
    %v22 = vld [vmem:[%s1 + $0x10] sm:$0xff]
    %v23 = vld [vmem:[%s1 + $0x18] sm:$0xff]
    %v24 = vld [vmem:[%s1 + $0x20] sm:$0xff]
    %v25 = vld [vmem:[%s1 + $0x28] sm:$0xff]
    %v26 = vld [vmem:[%s1 + $0x30] sm:$0xff]
    %v27 = vld [vmem:[%s1 + $0x38] sm:$0xff]
    %v28 = vld [vmem:[%s1 + $0x40] sm:$0xff]
    %v29 = vld [vmem:[%s1 + $0x48] sm:$0xff]
    %v30 = vld [vmem:[%s1 + $0x50] sm:$0xff]
    %v31 = vld [vmem:[%s1 + $0x58] sm:$0xff]
    %v32 = vld [vmem:[%s1 + $0x60] sm:$0xff]
    %v33 = vld [vmem:[%s1 + $0x68] sm:$0xff]
    %v34 = vld [vmem:[%s1 + $0x70] sm:$0xff]
    %v35 = vld [vmem:[%s1 + $0x78] sm:$0xff]
    %v36 = vld [vmem:[%s1 + $0x80] sm:$0xff]
    %v37 = vld [vmem:[%s1 + $0x88] sm:$0xff]
    %v38 = vld [vmem:[%s1 + $0x90] sm:$0xff]
    %v39 = vld [vmem:[%s1 + $0x98] sm:$0xff]
    %v40 = vld [vmem:[%s1 + $0xa0] sm:$0xff]
    %v41 = vld [vmem:[%s1 + $0xa8] sm:$0xff]
    %v42 = vld [vmem:[%s1 + $0xb0] sm:$0xff]
    %v43 = vld [vmem:[%s1 + $0xb8] sm:$0xff]
    %v44 = vld [vmem:[%s1 + $0xc0] sm:$0xff]
    %v45 = vld [vmem:[%s1 + $0xc8] sm:$0xff]
    %v46 = vld [vmem:[%s1 + $0xd0] sm:$0xff]
    %v47 = vld [vmem:[%s1 + $0xd8] sm:$0xff]
    %v48 = vld [vmem:[%s1 + $0xe0] sm:$0xff]
    %v49 = vld [vmem:[%s1 + $0xe8] sm:$0xff]
    %v50 = vld [vmem:[%s1 + $0xf0] sm:$0xff]
    %v51 = vld [vmem:[%s1 + $0xf8] sm:$0xff]
    %v52 = vpack.c.bf16 %v21, %v20
    %v53 = vpack.c.bf16 %v23, %v22
    %v54 = vpack.c.bf16 %v25, %v24
    %v55 = vpack.c.bf16 %v27, %v26
    %v56 = vpack.c.bf16 %v29, %v28
    %v57 = vpack.c.bf16 %v31, %v30
    %v58 = vpack.c.bf16 %v33, %v32
    %v59 = vpack.c.bf16 %v35, %v34
    %v60 = vpack.c.bf16 %v37, %v36
    %v61 = vpack.c.bf16 %v39, %v38
    %v62 = vpack.c.bf16 %v41, %v40
    %v63 = vpack.c.bf16 %v43, %v42
    %v64 = vpack.c.bf16 %v45, %v44
    %v65 = vpack.c.bf16 %v47, %v46
    %v66 = vpack.c.bf16 %v49, %v48
    %v67 = vpack.c.bf16 %v51, %v50
    %v68 = vpack.c.bf16 %v19, %v19
    %vm69 = vcmask 64512
    %v71 = vsel %vm69, %v52, 0
    %v74 = vsel %vm69, %v53, 0
    %v77 = vsel %vm69, %v54, 0
    %v80 = vsel %vm69, %v55, 0
    %v83 = vsel %vm69, %v56, 0
    %v86 = vsel %vm69, %v57, 0
    %v89 = vsel %vm69, %v58, 0
    %v92 = vsel %vm69, %v59, 0
    %v95 = vsel %vm69, %v60, 0
    %v98 = vsel %vm69, %v61, 0
    %v101 = vsel %vm69, %v62, 0
    %v104 = vsel %vm69, %v63, 0
    %v107 = vsel %vm69, %v64, 0
    %v110 = vsel %vm69, %v65, 0
    %v113 = vsel %vm69, %v66, 0
    %v116 = vsel %vm69, %v67, 0
    %vm118 = vcmask 1043456
    %v120 = vsel %vm118, %v68, 0
    %122 = vmatprep.subr.bf16.mxu0 0
    %123 = vmatpush1.bf16.msra.mxu0 %v120
    %124 = vmatprep.subr.bf16.mxu0 0
    %125 = vmatpush1.bf16.msra.mxu0 0
    %126 = vmatprep.subr.bf16.mxu0 0
    %127 = vmatpush1.bf16.msra.mxu0 0
    %128 = vmatprep.subr.bf16.mxu0 0
    %129 = vmatpush1.bf16.msra.mxu0 0
    %130 = vmatprep.subr.bf16.mxu0 0
    %131 = vmatpush1.bf16.msra.mxu0 0
    %132 = vmatprep.subr.bf16.mxu0 0
    %133 = vmatpush1.bf16.msra.mxu0 0
    %134 = vmatprep.subr.bf16.mxu0 0
    %135 = vmatpush1.bf16.msra.mxu0 0
    %136 = vmatprep.subr.bf16.mxu0 0
    %137 = vmatpush1.bf16.msra.mxu0 0
    %138 = vmatprep.subr.bf16.mxu0 0
    %139 = vmatpush1.bf16.msra.mxu0 0
    %140 = vmatprep.subr.bf16.mxu0 0
    %141 = vmatpush1.bf16.msra.mxu0 0
    %142 = vmatprep.subr.bf16.mxu0 0
    %143 = vmatpush1.bf16.msra.mxu0 0
    %144 = vmatprep.subr.bf16.mxu0 0
    %145 = vmatpush1.bf16.msra.mxu0 0
    %146 = vmatprep.subr.bf16.mxu0 0
    %147 = vmatpush1.bf16.msra.mxu0 0
    %148 = vmatprep.subr.bf16.mxu0 0
    %149 = vmatpush1.bf16.msra.mxu0 0
    %150 = vmatprep.subr.bf16.mxu0 0
    %151 = vmatpush1.bf16.msra.mxu0 0
    %152 = vmatprep.subr.bf16.mxu0 0
    %153 = vmatpush1.bf16.msra.mxu0 0
    %154 = vmatprep.mubr.bf16.mxu0 0
    %155 = vmatmul.mubr.bf16.gmra.mrb[0].mxu0 %v71
    %v156 = vpop.f32.mrb[0].mxu0
    %v157 = vadd.f32 0.0, %v156
    %v158 = vpop.f32.mrb[0].mxu0
    %v159 = vpop.f32.mrb[0].mxu0
    %v160 = vadd.f32 0.0, %v159
    %v161 = vpop.f32.mrb[0].mxu0
    %162 = vmatprep.mubr.bf16.mxu0 0
    %163 = vmatmul.mubr.bf16.gmra.mrb[0].mxu0 %v74
    %v164 = vpop.f32.mrb[0].mxu0
    %v165 = vadd.f32 0.0, %v164
    %v166 = vpop.f32.mrb[0].mxu0
    %v167 = vpop.f32.mrb[0].mxu0
    %v168 = vadd.f32 0.0, %v167
    %v169 = vpop.f32.mrb[0].mxu0
    %170 = vmatprep.mubr.bf16.mxu0 0
    %171 = vmatmul.mubr.bf16.gmra.mrb[0].mxu0 %v77
    %v172 = vpop.f32.mrb[0].mxu0
    %v173 = vadd.f32 0.0, %v172
    %v174 = vpop.f32.mrb[0].mxu0
    %v175 = vpop.f32.mrb[0].mxu0
    %v176 = vadd.f32 0.0, %v175
    %v177 = vpop.f32.mrb[0].mxu0
    %178 = vmatprep.mubr.bf16.mxu0 0
    %179 = vmatmul.mubr.bf16.gmra.mrb[0].mxu0 %v80
    %v180 = vpop.f32.mrb[0].mxu0
    %v181 = vadd.f32 0.0, %v180
    %v182 = vpop.f32.mrb[0].mxu0
    %v183 = vpop.f32.mrb[0].mxu0
    %v184 = vadd.f32 0.0, %v183
    %v185 = vpop.f32.mrb[0].mxu0
    %186 = vmatprep.mubr.bf16.mxu0 0
    %187 = vmatmul.mubr.bf16.gmra.mrb[0].mxu0 %v83
    %v188 = vpop.f32.mrb[0].mxu0
    %v189 = vadd.f32 0.0, %v188
    %v190 = vpop.f32.mrb[0].mxu0
    %v191 = vpop.f32.mrb[0].mxu0
    %v192 = vadd.f32 0.0, %v191
    %v193 = vpop.f32.mrb[0].mxu0
    %194 = vmatprep.mubr.bf16.mxu0 0
    %195 = vmatmul.mubr.bf16.gmra.mrb[0].mxu0 %v86
    %v196 = vpop.f32.mrb[0].mxu0
    %v197 = vadd.f32 0.0, %v196
    %v198 = vpop.f32.mrb[0].mxu0
    %v199 = vpop.f32.mrb[0].mxu0
    %v200 = vadd.f32 0.0, %v199
    %v201 = vpop.f32.mrb[0].mxu0
    %202 = vmatprep.mubr.bf16.mxu0 0
    %203 = vmatmul.mubr.bf16.gmra.mrb[0].mxu0 %v89
    %v204 = vpop.f32.mrb[0].mxu0
    %v205 = vadd.f32 0.0, %v204
    %v206 = vpop.f32.mrb[0].mxu0
    %v207 = vpop.f32.mrb[0].mxu0
    %v208 = vadd.f32 0.0, %v207
    %v209 = vpop.f32.mrb[0].mxu0
    %210 = vmatprep.mubr.bf16.mxu0 0
    %211 = vmatmul.mubr.bf16.gmra.mrb[0].mxu0 %v92
    %v212 = vpop.f32.mrb[0].mxu0
    %v213 = vadd.f32 0.0, %v212
    %v214 = vpop.f32.mrb[0].mxu0
    %v215 = vpop.f32.mrb[0].mxu0
    %v216 = vadd.f32 0.0, %v215
    %v217 = vpop.f32.mrb[0].mxu0
    %218 = vmatprep.mubr.bf16.mxu0 0
    %219 = vmatmul.mubr.bf16.gmra.mrb[0].mxu0 %v95
    %v220 = vpop.f32.mrb[0].mxu0
    %v221 = vadd.f32 0.0, %v220
    %v222 = vpop.f32.mrb[0].mxu0
    %v223 = vpop.f32.mrb[0].mxu0
    %v224 = vadd.f32 0.0, %v223
    %v225 = vpop.f32.mrb[0].mxu0
    %226 = vmatprep.mubr.bf16.mxu0 0
    %227 = vmatmul.mubr.bf16.gmra.mrb[0].mxu0 %v98
    %v228 = vpop.f32.mrb[0].mxu0
    %v229 = vadd.f32 0.0, %v228
    %v230 = vpop.f32.mrb[0].mxu0
    %v231 = vpop.f32.mrb[0].mxu0
    %v232 = vadd.f32 0.0, %v231
    %v233 = vpop.f32.mrb[0].mxu0
    %234 = vmatprep.mubr.bf16.mxu0 0
    %235 = vmatmul.mubr.bf16.gmra.mrb[0].mxu0 %v101
    %v236 = vpop.f32.mrb[0].mxu0
    %v237 = vadd.f32 0.0, %v236
    %v238 = vpop.f32.mrb[0].mxu0
    %v239 = vpop.f32.mrb[0].mxu0
    %v240 = vadd.f32 0.0, %v239
    %v241 = vpop.f32.mrb[0].mxu0
    %242 = vmatprep.mubr.bf16.mxu0 0
    %243 = vmatmul.mubr.bf16.gmra.mrb[0].mxu0 %v104
    %v244 = vpop.f32.mrb[0].mxu0
    %v245 = vadd.f32 0.0, %v244
    %v246 = vpop.f32.mrb[0].mxu0
    %v247 = vpop.f32.mrb[0].mxu0
    %v248 = vadd.f32 0.0, %v247
    %v249 = vpop.f32.mrb[0].mxu0
    %250 = vmatprep.mubr.bf16.mxu0 0
    %251 = vmatmul.mubr.bf16.gmra.mrb[0].mxu0 %v107
    %v252 = vpop.f32.mrb[0].mxu0
    %v253 = vadd.f32 0.0, %v252
    %v254 = vpop.f32.mrb[0].mxu0
    %v255 = vpop.f32.mrb[0].mxu0
    %v256 = vadd.f32 0.0, %v255
    %v257 = vpop.f32.mrb[0].mxu0
    %258 = vmatprep.mubr.bf16.mxu0 0
    %259 = vmatmul.mubr.bf16.gmra.mrb[0].mxu0 %v110
    %v260 = vpop.f32.mrb[0].mxu0
    %v261 = vadd.f32 0.0, %v260
    %v262 = vpop.f32.mrb[0].mxu0
    %v263 = vpop.f32.mrb[0].mxu0
    %v264 = vadd.f32 0.0, %v263
    %v265 = vpop.f32.mrb[0].mxu0
    %266 = vmatprep.mubr.bf16.mxu0 0
    %267 = vmatmul.mubr.bf16.gmra.mrb[0].mxu0 %v113
    %v268 = vpop.f32.mrb[0].mxu0
    %v269 = vadd.f32 0.0, %v268
    %v270 = vpop.f32.mrb[0].mxu0
    %v271 = vpop.f32.mrb[0].mxu0
    %v272 = vadd.f32 0.0, %v271
    %v273 = vpop.f32.mrb[0].mxu0
    %274 = vmatprep.mubr.bf16.mxu0 0
    %275 = vmatmul.mubr.bf16.gmra.mrb[0].mxu0 %v116
    %v276 = vpop.f32.mrb[0].mxu0
    %v277 = vadd.f32 0.0, %v276
    %v278 = vpop.f32.mrb[0].mxu0
    %v279 = vpop.f32.mrb[0].mxu0
    %v280 = vadd.f32 0.0, %v279
    %v281 = vpop.f32.mrb[0].mxu0
    %282 = vdwg.mxu0
    %v283 = vmul.f32 %v157, 0.3
    %v284 = vmul.f32 %v160, 0.3
    %v285 = vmul.f32 %v165, 0.3
    %v286 = vmul.f32 %v168, 0.3
    %v287 = vmul.f32 %v173, 0.3
    %v288 = vmul.f32 %v176, 0.3
    %v289 = vmul.f32 %v181, 0.3
    %v290 = vmul.f32 %v184, 0.3
    %v291 = vmul.f32 %v189, 0.3
    %v292 = vmul.f32 %v192, 0.3
    %v293 = vmul.f32 %v197, 0.3
    %v294 = vmul.f32 %v200, 0.3
    %v295 = vmul.f32 %v205, 0.3
    %v296 = vmul.f32 %v208, 0.3
    %v297 = vmul.f32 %v213, 0.3
    %v298 = vmul.f32 %v216, 0.3
    %v299 = vmul.f32 %v221, 0.3
    %v300 = vmul.f32 %v224, 0.3
    %v301 = vmul.f32 %v229, 0.3
    %v302 = vmul.f32 %v232, 0.3
    %v303 = vmul.f32 %v237, 0.3
    %v304 = vmul.f32 %v240, 0.3
    %v305 = vmul.f32 %v245, 0.3
    %v306 = vmul.f32 %v248, 0.3
    %v307 = vmul.f32 %v253, 0.3
    %v308 = vmul.f32 %v256, 0.3
    %v309 = vmul.f32 %v261, 0.3
    %v310 = vmul.f32 %v264, 0.3
    %v311 = vmul.f32 %v269, 0.3
    %v312 = vmul.f32 %v272, 0.3
    %v313 = vmul.f32 %v277, 0.3
    %v314 = vmul.f32 %v280, 0.3
    %v315 = vmax.f32 %v157, %v283
    %v316 = vmax.f32 %v160, %v284
    %v317 = vmax.f32 %v165, %v285
    %v318 = vmax.f32 %v168, %v286
    %v319 = vmax.f32 %v173, %v287
    %v320 = vmax.f32 %v176, %v288
    %v321 = vmax.f32 %v181, %v289
    %v322 = vmax.f32 %v184, %v290
    %v323 = vmax.f32 %v189, %v291
    %v324 = vmax.f32 %v192, %v292
    %v325 = vmax.f32 %v197, %v293
    %v326 = vmax.f32 %v200, %v294
    %v327 = vmax.f32 %v205, %v295
    %v328 = vmax.f32 %v208, %v296
    %v329 = vmax.f32 %v213, %v297
    %v330 = vmax.f32 %v216, %v298
    %v331 = vmax.f32 %v221, %v299
    %v332 = vmax.f32 %v224, %v300
    %v333 = vmax.f32 %v229, %v301
    %v334 = vmax.f32 %v232, %v302
    %v335 = vmax.f32 %v237, %v303
    %v336 = vmax.f32 %v240, %v304
    %v337 = vmax.f32 %v245, %v305
    %v338 = vmax.f32 %v248, %v306
    %v339 = vmax.f32 %v253, %v307
    %v340 = vmax.f32 %v256, %v308
    %v341 = vmax.f32 %v261, %v309
    %v342 = vmax.f32 %v264, %v310
    %v343 = vmax.f32 %v269, %v311
    %v344 = vmax.f32 %v272, %v312
    %v345 = vmax.f32 %v277, %v313
    %v346 = vmax.f32 %v280, %v314
    %v347 = vld [vmem:[%s2] sm:$0xff]
    %v348 = vld [vmem:[%s2 + $0x8] sm:$0xff]
    %v349 = vld [vmem:[%s2 + $0x10] sm:$0xff]
    %v350 = vld [vmem:[%s2 + $0x18] sm:$0xff]
    %v351 = vld [vmem:[%s2 + $0x20] sm:$0xff]
    %v352 = vld [vmem:[%s2 + $0x28] sm:$0xff]
    %v353 = vld [vmem:[%s2 + $0x30] sm:$0xff]
    %v354 = vld [vmem:[%s2 + $0x38] sm:$0xff]
    %v355 = vld [vmem:[%s2 + $0x40] sm:$0xff]
    %v356 = vld [vmem:[%s2 + $0x48] sm:$0xff]
    %v357 = vld [vmem:[%s2 + $0x50] sm:$0xff]
    %v358 = vld [vmem:[%s2 + $0x58] sm:$0xff]
    %v359 = vld [vmem:[%s2 + $0x60] sm:$0xff]
    %v360 = vld [vmem:[%s2 + $0x68] sm:$0xff]
    %v361 = vld [vmem:[%s2 + $0x70] sm:$0xff]
    %v362 = vld [vmem:[%s2 + $0x78] sm:$0xff]
    %v363 = vld [vmem:[%s2 + $0x80] sm:$0xff]
    %v364 = vld [vmem:[%s2 + $0x88] sm:$0xff]
    %v365 = vld [vmem:[%s2 + $0x90] sm:$0xff]
    %v366 = vld [vmem:[%s2 + $0x98] sm:$0xff]
    %v367 = vld [vmem:[%s2 + $0xa0] sm:$0xff]
    %v368 = vld [vmem:[%s2 + $0xa8] sm:$0xff]
    %v369 = vld [vmem:[%s2 + $0xb0] sm:$0xff]
    %v370 = vld [vmem:[%s2 + $0xb8] sm:$0xff]
    %v371 = vld [vmem:[%s2 + $0xc0] sm:$0xff]
    %v372 = vld [vmem:[%s2 + $0xc8] sm:$0xff]
    %v373 = vld [vmem:[%s2 + $0xd0] sm:$0xff]
    %v374 = vld [vmem:[%s2 + $0xd8] sm:$0xff]
    %v375 = vld [vmem:[%s2 + $0xe0] sm:$0xff]
    %v376 = vld [vmem:[%s2 + $0xe8] sm:$0xff]
    %v377 = vld [vmem:[%s2 + $0xf0] sm:$0xff]
    %v378 = vld [vmem:[%s2 + $0xf8] sm:$0xff]
    %v379 = vpack.c.bf16 %v316, %v315
    %v380 = vpack.c.bf16 %v318, %v317
    %v381 = vpack.c.bf16 %v320, %v319
    %v382 = vpack.c.bf16 %v322, %v321
    %v383 = vpack.c.bf16 %v324, %v323
    %v384 = vpack.c.bf16 %v326, %v325
    %v385 = vpack.c.bf16 %v328, %v327
    %v386 = vpack.c.bf16 %v330, %v329
    %v387 = vpack.c.bf16 %v332, %v331
    %v388 = vpack.c.bf16 %v334, %v333
    %v389 = vpack.c.bf16 %v336, %v335
    %v390 = vpack.c.bf16 %v338, %v337
    %v391 = vpack.c.bf16 %v340, %v339
    %v392 = vpack.c.bf16 %v342, %v341
    %v393 = vpack.c.bf16 %v344, %v343
    %v394 = vpack.c.bf16 %v346, %v345
    %396 = vset.pattern.permute.xlu0 3
    %397 = vperm.xlu0 %396, %v20
    %v398 = vpop.permute.xlu0 %397
    %401 = vset.pattern.permute.xlu0 3
    %402 = vperm.xlu0 %401, %v21
    %v403 = vpop.permute.xlu0 %402
    %406 = vset.pattern.permute.xlu0 3
    %407 = vperm.xlu0 %406, %v22
    %v408 = vpop.permute.xlu0 %407
    %411 = vset.pattern.permute.xlu0 3
    %412 = vperm.xlu0 %411, %v23
    %v413 = vpop.permute.xlu0 %412
    %416 = vset.pattern.permute.xlu0 3
    %417 = vperm.xlu0 %416, %v24
    %v418 = vpop.permute.xlu0 %417
    %421 = vset.pattern.permute.xlu0 3
    %422 = vperm.xlu0 %421, %v25
    %v423 = vpop.permute.xlu0 %422
    %426 = vset.pattern.permute.xlu0 3
    %427 = vperm.xlu0 %426, %v26
    %v428 = vpop.permute.xlu0 %427
    %431 = vset.pattern.permute.xlu0 3
    %432 = vperm.xlu0 %431, %v27
    %v433 = vpop.permute.xlu0 %432
    %436 = vset.pattern.permute.xlu0 3
    %437 = vperm.xlu0 %436, %v28
    %v438 = vpop.permute.xlu0 %437
    %441 = vset.pattern.permute.xlu0 3
    %442 = vperm.xlu0 %441, %v29
    %v443 = vpop.permute.xlu0 %442
    %446 = vset.pattern.permute.xlu0 3
    %447 = vperm.xlu0 %446, %v30
    %v448 = vpop.permute.xlu0 %447
    %451 = vset.pattern.permute.xlu0 3
    %452 = vperm.xlu0 %451, %v31
    %v453 = vpop.permute.xlu0 %452
    %456 = vset.pattern.permute.xlu0 3
    %457 = vperm.xlu0 %456, %v32
    %v458 = vpop.permute.xlu0 %457
    %461 = vset.pattern.permute.xlu0 3
    %462 = vperm.xlu0 %461, %v33
    %v463 = vpop.permute.xlu0 %462
    %466 = vset.pattern.permute.xlu0 3
    %467 = vperm.xlu0 %466, %v34
    %v468 = vpop.permute.xlu0 %467
    %471 = vset.pattern.permute.xlu0 3
    %472 = vperm.xlu0 %471, %v35
    %v473 = vpop.permute.xlu0 %472
    %476 = vset.pattern.permute.xlu0 3
    %477 = vperm.xlu0 %476, %v36
    %v478 = vpop.permute.xlu0 %477
    %481 = vset.pattern.permute.xlu0 3
    %482 = vperm.xlu0 %481, %v37
    %v483 = vpop.permute.xlu0 %482
    %486 = vset.pattern.permute.xlu0 3
    %487 = vperm.xlu0 %486, %v38
    %v488 = vpop.permute.xlu0 %487
    %491 = vset.pattern.permute.xlu0 3
    %492 = vperm.xlu0 %491, %v39
    %v493 = vpop.permute.xlu0 %492
    %496 = vset.pattern.permute.xlu0 3
    %497 = vperm.xlu0 %496, %v40
    %v498 = vpop.permute.xlu0 %497
    %501 = vset.pattern.permute.xlu0 3
    %502 = vperm.xlu0 %501, %v41
    %v503 = vpop.permute.xlu0 %502
    %506 = vset.pattern.permute.xlu0 3
    %507 = vperm.xlu0 %506, %v42
    %v508 = vpop.permute.xlu0 %507
    %511 = vset.pattern.permute.xlu0 3
    %512 = vperm.xlu0 %511, %v43
    %v513 = vpop.permute.xlu0 %512
    %516 = vset.pattern.permute.xlu0 3
    %517 = vperm.xlu0 %516, %v44
    %v518 = vpop.permute.xlu0 %517
    %521 = vset.pattern.permute.xlu0 3
    %522 = vperm.xlu0 %521, %v45
    %v523 = vpop.permute.xlu0 %522
    %526 = vset.pattern.permute.xlu0 3
    %527 = vperm.xlu0 %526, %v46
    %v528 = vpop.permute.xlu0 %527
    %531 = vset.pattern.permute.xlu0 3
    %532 = vperm.xlu0 %531, %v47
    %v533 = vpop.permute.xlu0 %532
    %536 = vset.pattern.permute.xlu0 3
    %537 = vperm.xlu0 %536, %v48
    %v538 = vpop.permute.xlu0 %537
    %541 = vset.pattern.permute.xlu0 3
    %542 = vperm.xlu0 %541, %v49
    %v543 = vpop.permute.xlu0 %542
    %546 = vset.pattern.permute.xlu0 3
    %547 = vperm.xlu0 %546, %v50
    %v548 = vpop.permute.xlu0 %547
    %551 = vset.pattern.permute.xlu0 3
    %552 = vperm.xlu0 %551, %v51
    %v553 = vpop.permute.xlu0 %552
    %v587 = vunpack.c.l.b16 %v347
    %v588 = vunpack.c.h.b16 %v347
    %v589 = vunpack.c.l.b16 %v348
    %v590 = vunpack.c.h.b16 %v348
    %v591 = vunpack.c.l.b16 %v349
    %v592 = vunpack.c.h.b16 %v349
    %v593 = vunpack.c.l.b16 %v350
    %v594 = vunpack.c.h.b16 %v350
    %v595 = vunpack.c.l.b16 %v351
    %v596 = vunpack.c.h.b16 %v351
    %v597 = vunpack.c.l.b16 %v352
    %v598 = vunpack.c.h.b16 %v352
    %v599 = vunpack.c.l.b16 %v353
    %v600 = vunpack.c.h.b16 %v353
    %v601 = vunpack.c.l.b16 %v354
    %v602 = vunpack.c.h.b16 %v354
    %v603 = vunpack.c.l.b16 %v355
    %v604 = vunpack.c.h.b16 %v355
    %v605 = vunpack.c.l.b16 %v356
    %v606 = vunpack.c.h.b16 %v356
    %v607 = vunpack.c.l.b16 %v357
    %v608 = vunpack.c.h.b16 %v357
    %v609 = vunpack.c.l.b16 %v358
    %v610 = vunpack.c.h.b16 %v358
    %v611 = vunpack.c.l.b16 %v359
    %v612 = vunpack.c.h.b16 %v359
    %v613 = vunpack.c.l.b16 %v360
    %v614 = vunpack.c.h.b16 %v360
    %v615 = vunpack.c.l.b16 %v361
    %v616 = vunpack.c.h.b16 %v361
    %v617 = vunpack.c.l.b16 %v362
    %v618 = vunpack.c.h.b16 %v362
    %v619 = vunpack.c.l.b16 %v363
    %v620 = vunpack.c.h.b16 %v363
    %v621 = vunpack.c.l.b16 %v364
    %v622 = vunpack.c.h.b16 %v364
    %v623 = vunpack.c.l.b16 %v365
    %v624 = vunpack.c.h.b16 %v365
    %v625 = vunpack.c.l.b16 %v366
    %v626 = vunpack.c.h.b16 %v366
    %v627 = vunpack.c.l.b16 %v367
    %v628 = vunpack.c.h.b16 %v367
    %v629 = vunpack.c.l.b16 %v368
    %v630 = vunpack.c.h.b16 %v368
    %v631 = vunpack.c.l.b16 %v369
    %v632 = vunpack.c.h.b16 %v369
    %v633 = vunpack.c.l.b16 %v370
    %v634 = vunpack.c.h.b16 %v370
    %v635 = vunpack.c.l.b16 %v371
    %v636 = vunpack.c.h.b16 %v371
    %v637 = vunpack.c.l.b16 %v372
    %v638 = vunpack.c.h.b16 %v372
    %v639 = vunpack.c.l.b16 %v373
    %v640 = vunpack.c.h.b16 %v373
    %v641 = vunpack.c.l.b16 %v374
    %v642 = vunpack.c.h.b16 %v374
    %v643 = vunpack.c.l.b16 %v375
    %v644 = vunpack.c.h.b16 %v375
    %v645 = vunpack.c.l.b16 %v376
    %v646 = vunpack.c.h.b16 %v376
    %v647 = vunpack.c.l.b16 %v377
    %v648 = vunpack.c.h.b16 %v377
    %v649 = vunpack.c.l.b16 %v378
    %v650 = vunpack.c.h.b16 %v378
    %v651 = vpack.c.b16 %v589, %v587
    %v652 = vpack.c.b16 %v590, %v588
    %v653 = vpack.c.b16 %v593, %v591
    %v654 = vpack.c.b16 %v594, %v592
    %v655 = vpack.c.b16 %v597, %v595
    %v656 = vpack.c.b16 %v598, %v596
    %v657 = vpack.c.b16 %v601, %v599
    %v658 = vpack.c.b16 %v602, %v600
    %v659 = vpack.c.b16 %v605, %v603
    %v660 = vpack.c.b16 %v606, %v604
    %v661 = vpack.c.b16 %v609, %v607
    %v662 = vpack.c.b16 %v610, %v608
    %v663 = vpack.c.b16 %v613, %v611
    %v664 = vpack.c.b16 %v614, %v612
    %v665 = vpack.c.b16 %v617, %v615
    %v666 = vpack.c.b16 %v618, %v616
    %v667 = vpack.c.b16 %v621, %v619
    %v668 = vpack.c.b16 %v622, %v620
    %v669 = vpack.c.b16 %v625, %v623
    %v670 = vpack.c.b16 %v626, %v624
    %v671 = vpack.c.b16 %v629, %v627
    %v672 = vpack.c.b16 %v630, %v628
    %v673 = vpack.c.b16 %v633, %v631
    %v674 = vpack.c.b16 %v634, %v632
    %v675 = vpack.c.b16 %v637, %v635
    %v676 = vpack.c.b16 %v638, %v636
    %v677 = vpack.c.b16 %v641, %v639
    %v678 = vpack.c.b16 %v642, %v640
    %v679 = vpack.c.b16 %v645, %v643
    %v680 = vpack.c.b16 %v646, %v644
    %v681 = vpack.c.b16 %v649, %v647
    %v682 = vpack.c.b16 %v650, %v648
    %715 = vmatprep.subr.bf16.mxu0 0
    %716 = vmatpush1.bf16.msra.mxu0 %v379
    %717 = vmatprep.subr.bf16.mxu0 0
    %718 = vmatpush1.bf16.msra.mxu0 %v380
    %719 = vmatprep.subr.bf16.mxu0 0
    %720 = vmatpush1.bf16.msra.mxu0 %v381
    %721 = vmatprep.subr.bf16.mxu0 0
    %722 = vmatpush1.bf16.msra.mxu0 %v382
    %723 = vmatprep.subr.bf16.mxu0 0
    %724 = vmatpush1.bf16.msra.mxu0 %v383
    %725 = vmatprep.subr.bf16.mxu0 0
    %726 = vmatpush1.bf16.msra.mxu0 %v384
    %727 = vmatprep.subr.bf16.mxu0 0
    %728 = vmatpush1.bf16.msra.mxu0 %v385
    %729 = vmatprep.subr.bf16.mxu0 0
    %730 = vmatpush1.bf16.msra.mxu0 %v386
    %731 = vmatprep.subr.bf16.mxu0 0
    %732 = vmatpush1.bf16.msra.mxu0 %v387
    %733 = vmatprep.subr.bf16.mxu0 0
    %734 = vmatpush1.bf16.msra.mxu0 %v388
    %735 = vmatprep.subr.bf16.mxu0 0
    %736 = vmatpush1.bf16.msra.mxu0 %v389
    %737 = vmatprep.subr.bf16.mxu0 0
    %738 = vmatpush1.bf16.msra.mxu0 %v390
    %739 = vmatprep.subr.bf16.mxu0 0
    %740 = vmatpush1.bf16.msra.mxu0 %v391
    %741 = vmatprep.subr.bf16.mxu0 0
    %742 = vmatpush1.bf16.msra.mxu0 %v392
    %743 = vmatprep.subr.bf16.mxu0 0
    %744 = vmatpush1.bf16.msra.mxu0 %v393
    %745 = vmatprep.subr.bf16.mxu0 0
    %746 = vmatpush1.bf16.msra.mxu0 %v394
    %747 = vmatprep.mubr.bf16.mxu0 %v652
    %748 = vmatmul.mubr.bf16.gmra.mrb[0].mxu0 %v651
    %v749 = vpop.f32.mrb[0].mxu0
    %v750 = vadd.f32 %v398, %v749
    %v751 = vpop.f32.mrb[0].mxu0
    %v752 = vpop.f32.mrb[0].mxu0
    %v753 = vadd.f32 %v403, %v752
    %v754 = vpop.f32.mrb[0].mxu0
    %755 = vmatprep.mubr.bf16.mxu0 %v654
    %756 = vmatmul.mubr.bf16.gmra.mrb[0].mxu0 %v653
    %v757 = vpop.f32.mrb[0].mxu0
    %v758 = vadd.f32 %v408, %v757
    %v759 = vpop.f32.mrb[0].mxu0
    %v760 = vpop.f32.mrb[0].mxu0
    %v761 = vadd.f32 %v413, %v760
    %v762 = vpop.f32.mrb[0].mxu0
    %763 = vmatprep.mubr.bf16.mxu0 %v656
    %764 = vmatmul.mubr.bf16.gmra.mrb[0].mxu0 %v655
    %v765 = vpop.f32.mrb[0].mxu0
    %v766 = vadd.f32 %v418, %v765
    %v767 = vpop.f32.mrb[0].mxu0
    %v768 = vpop.f32.mrb[0].mxu0
    %v769 = vadd.f32 %v423, %v768
    %v770 = vpop.f32.mrb[0].mxu0
    %771 = vmatprep.mubr.bf16.mxu0 %v658
    %772 = vmatmul.mubr.bf16.gmra.mrb[0].mxu0 %v657
    %v773 = vpop.f32.mrb[0].mxu0
    %v774 = vadd.f32 %v428, %v773
    %v775 = vpop.f32.mrb[0].mxu0
    %v776 = vpop.f32.mrb[0].mxu0
    %v777 = vadd.f32 %v433, %v776
    %v778 = vpop.f32.mrb[0].mxu0
    %779 = vmatprep.mubr.bf16.mxu0 %v660
    %780 = vmatmul.mubr.bf16.gmra.mrb[0].mxu0 %v659
    %v781 = vpop.f32.mrb[0].mxu0
    %v782 = vadd.f32 %v438, %v781
    %v783 = vpop.f32.mrb[0].mxu0
    %v784 = vpop.f32.mrb[0].mxu0
    %v785 = vadd.f32 %v443, %v784
    %v786 = vpop.f32.mrb[0].mxu0
    %787 = vmatprep.mubr.bf16.mxu0 %v662
    %788 = vmatmul.mubr.bf16.gmra.mrb[0].mxu0 %v661
    %v789 = vpop.f32.mrb[0].mxu0
    %v790 = vadd.f32 %v448, %v789
    %v791 = vpop.f32.mrb[0].mxu0
    %v792 = vpop.f32.mrb[0].mxu0
    %v793 = vadd.f32 %v453, %v792
    %v794 = vpop.f32.mrb[0].mxu0
    %795 = vmatprep.mubr.bf16.mxu0 %v664
    %796 = vmatmul.mubr.bf16.gmra.mrb[0].mxu0 %v663
    %v797 = vpop.f32.mrb[0].mxu0
    %v798 = vadd.f32 %v458, %v797
    %v799 = vpop.f32.mrb[0].mxu0
    %v800 = vpop.f32.mrb[0].mxu0
    %v801 = vadd.f32 %v463, %v800
    %v802 = vpop.f32.mrb[0].mxu0
    %803 = vmatprep.mubr.bf16.mxu0 %v666
    %804 = vmatmul.mubr.bf16.gmra.mrb[0].mxu0 %v665
    %v805 = vpop.f32.mrb[0].mxu0
    %v806 = vadd.f32 %v468, %v805
    %v807 = vpop.f32.mrb[0].mxu0
    %v808 = vpop.f32.mrb[0].mxu0
    %v809 = vadd.f32 %v473, %v808
    %v810 = vpop.f32.mrb[0].mxu0
    %811 = vmatprep.mubr.bf16.mxu0 %v668
    %812 = vmatmul.mubr.bf16.gmra.mrb[0].mxu0 %v667
    %v813 = vpop.f32.mrb[0].mxu0
    %v814 = vadd.f32 %v478, %v813
    %v815 = vpop.f32.mrb[0].mxu0
    %v816 = vpop.f32.mrb[0].mxu0
    %v817 = vadd.f32 %v483, %v816
    %v818 = vpop.f32.mrb[0].mxu0
    %819 = vmatprep.mubr.bf16.mxu0 %v670
    %820 = vmatmul.mubr.bf16.gmra.mrb[0].mxu0 %v669
    %v821 = vpop.f32.mrb[0].mxu0
    %v822 = vadd.f32 %v488, %v821
    %v823 = vpop.f32.mrb[0].mxu0
    %v824 = vpop.f32.mrb[0].mxu0
    %v825 = vadd.f32 %v493, %v824
    %v826 = vpop.f32.mrb[0].mxu0
    %827 = vmatprep.mubr.bf16.mxu0 %v672
    %828 = vmatmul.mubr.bf16.gmra.mrb[0].mxu0 %v671
    %v829 = vpop.f32.mrb[0].mxu0
    %v830 = vadd.f32 %v498, %v829
    %v831 = vpop.f32.mrb[0].mxu0
    %v832 = vpop.f32.mrb[0].mxu0
    %v833 = vadd.f32 %v503, %v832
    %v834 = vpop.f32.mrb[0].mxu0
    %835 = vmatprep.mubr.bf16.mxu0 %v674
    %836 = vmatmul.mubr.bf16.gmra.mrb[0].mxu0 %v673
    %v837 = vpop.f32.mrb[0].mxu0
    %v838 = vadd.f32 %v508, %v837
    %v839 = vpop.f32.mrb[0].mxu0
    %v840 = vpop.f32.mrb[0].mxu0
    %v841 = vadd.f32 %v513, %v840
    %v842 = vpop.f32.mrb[0].mxu0
    %843 = vmatprep.mubr.bf16.mxu0 %v676
    %844 = vmatmul.mubr.bf16.gmra.mrb[0].mxu0 %v675
    %v845 = vpop.f32.mrb[0].mxu0
    %v846 = vadd.f32 %v518, %v845
    %v847 = vpop.f32.mrb[0].mxu0
    %v848 = vpop.f32.mrb[0].mxu0
    %v849 = vadd.f32 %v523, %v848
    %v850 = vpop.f32.mrb[0].mxu0
    %851 = vmatprep.mubr.bf16.mxu0 %v678
    %852 = vmatmul.mubr.bf16.gmra.mrb[0].mxu0 %v677
    %v853 = vpop.f32.mrb[0].mxu0
    %v854 = vadd.f32 %v528, %v853
    %v855 = vpop.f32.mrb[0].mxu0
    %v856 = vpop.f32.mrb[0].mxu0
    %v857 = vadd.f32 %v533, %v856
    %v858 = vpop.f32.mrb[0].mxu0
    %859 = vmatprep.mubr.bf16.mxu0 %v680
    %860 = vmatmul.mubr.bf16.gmra.mrb[0].mxu0 %v679
    %v861 = vpop.f32.mrb[0].mxu0
    %v862 = vadd.f32 %v538, %v861
    %v863 = vpop.f32.mrb[0].mxu0
    %v864 = vpop.f32.mrb[0].mxu0
    %v865 = vadd.f32 %v543, %v864
    %v866 = vpop.f32.mrb[0].mxu0
    %867 = vmatprep.mubr.bf16.mxu0 %v682
    %868 = vmatmul.mubr.bf16.gmra.mrb[0].mxu0 %v681
    %v869 = vpop.f32.mrb[0].mxu0
    %v870 = vadd.f32 %v548, %v869
    %v871 = vpop.f32.mrb[0].mxu0
    %v872 = vpop.f32.mrb[0].mxu0
    %v873 = vadd.f32 %v553, %v872
    %v874 = vpop.f32.mrb[0].mxu0
    %875 = vdwg.mxu0
    %v876 = vmul.f32 %v750, 0.3
    %v877 = vmul.f32 %v753, 0.3
    %v878 = vmul.f32 %v758, 0.3
    %v879 = vmul.f32 %v761, 0.3
    %v880 = vmul.f32 %v766, 0.3
    %v881 = vmul.f32 %v769, 0.3
    %v882 = vmul.f32 %v774, 0.3
    %v883 = vmul.f32 %v777, 0.3
    %v884 = vmul.f32 %v782, 0.3
    %v885 = vmul.f32 %v785, 0.3
    %v886 = vmul.f32 %v790, 0.3
    %v887 = vmul.f32 %v793, 0.3
    %v888 = vmul.f32 %v798, 0.3
    %v889 = vmul.f32 %v801, 0.3
    %v890 = vmul.f32 %v806, 0.3
    %v891 = vmul.f32 %v809, 0.3
    %v892 = vmul.f32 %v814, 0.3
    %v893 = vmul.f32 %v817, 0.3
    %v894 = vmul.f32 %v822, 0.3
    %v895 = vmul.f32 %v825, 0.3
    %v896 = vmul.f32 %v830, 0.3
    %v897 = vmul.f32 %v833, 0.3
    %v898 = vmul.f32 %v838, 0.3
    %v899 = vmul.f32 %v841, 0.3
    %v900 = vmul.f32 %v846, 0.3
    %v901 = vmul.f32 %v849, 0.3
    %v902 = vmul.f32 %v854, 0.3
    %v903 = vmul.f32 %v857, 0.3
    %v904 = vmul.f32 %v862, 0.3
    %v905 = vmul.f32 %v865, 0.3
    %v906 = vmul.f32 %v870, 0.3
    %v907 = vmul.f32 %v873, 0.3
    %v908 = vmax.f32 %v750, %v876
    %v909 = vmax.f32 %v753, %v877
    %v910 = vmax.f32 %v758, %v878
    %v911 = vmax.f32 %v761, %v879
    %v912 = vmax.f32 %v766, %v880
    %v913 = vmax.f32 %v769, %v881
    %v914 = vmax.f32 %v774, %v882
    %v915 = vmax.f32 %v777, %v883
    %v916 = vmax.f32 %v782, %v884
    %v917 = vmax.f32 %v785, %v885
    %v918 = vmax.f32 %v790, %v886
    %v919 = vmax.f32 %v793, %v887
    %v920 = vmax.f32 %v798, %v888
    %v921 = vmax.f32 %v801, %v889
    %v922 = vmax.f32 %v806, %v890
    %v923 = vmax.f32 %v809, %v891
    %v924 = vmax.f32 %v814, %v892
    %v925 = vmax.f32 %v817, %v893
    %v926 = vmax.f32 %v822, %v894
    %v927 = vmax.f32 %v825, %v895
    %v928 = vmax.f32 %v830, %v896
    %v929 = vmax.f32 %v833, %v897
    %v930 = vmax.f32 %v838, %v898
    %v931 = vmax.f32 %v841, %v899
    %v932 = vmax.f32 %v846, %v900
    %v933 = vmax.f32 %v849, %v901
    %v934 = vmax.f32 %v854, %v902
    %v935 = vmax.f32 %v857, %v903
    %v936 = vmax.f32 %v862, %v904
    %v937 = vmax.f32 %v865, %v905
    %v938 = vmax.f32 %v870, %v906
    %v939 = vmax.f32 %v873, %v907
    %v940 = vld [vmem:[%s3] sm:$0xff]
    %v941 = vpack.c.bf16 %v909, %v908
    %v942 = vpack.c.bf16 %v911, %v910
    %v943 = vpack.c.bf16 %v913, %v912
    %v944 = vpack.c.bf16 %v915, %v914
    %v945 = vpack.c.bf16 %v917, %v916
    %v946 = vpack.c.bf16 %v919, %v918
    %v947 = vpack.c.bf16 %v921, %v920
    %v948 = vpack.c.bf16 %v923, %v922
    %v949 = vpack.c.bf16 %v925, %v924
    %v950 = vpack.c.bf16 %v927, %v926
    %v951 = vpack.c.bf16 %v929, %v928
    %v952 = vpack.c.bf16 %v931, %v930
    %v953 = vpack.c.bf16 %v933, %v932
    %v954 = vpack.c.bf16 %v935, %v934
    %v955 = vpack.c.bf16 %v937, %v936
    %v956 = vpack.c.bf16 %v939, %v938
    %v958 = vunpack.c.l.b16 %v940
    %v959 = vunpack.c.h.b16 %v940
    %v960 = vpack.c.b16 %v958, %v958
    %v961 = vpack.c.b16 %v959, %v959
    %964 = vmatprep.subr.bf16.mxu0 0
    %965 = vmatpush1.bf16.msra.mxu0 %v941
    %966 = vmatprep.subr.bf16.mxu0 0
    %967 = vmatpush1.bf16.msra.mxu0 %v942
    %968 = vmatprep.subr.bf16.mxu0 0
    %969 = vmatpush1.bf16.msra.mxu0 %v943
    %970 = vmatprep.subr.bf16.mxu0 0
    %971 = vmatpush1.bf16.msra.mxu0 %v944
    %972 = vmatprep.subr.bf16.mxu0 0
    %973 = vmatpush1.bf16.msra.mxu0 %v945
    %974 = vmatprep.subr.bf16.mxu0 0
    %975 = vmatpush1.bf16.msra.mxu0 %v946
    %976 = vmatprep.subr.bf16.mxu0 0
    %977 = vmatpush1.bf16.msra.mxu0 %v947
    %978 = vmatprep.subr.bf16.mxu0 0
    %979 = vmatpush1.bf16.msra.mxu0 %v948
    %980 = vmatprep.subr.bf16.mxu0 0
    %981 = vmatpush1.bf16.msra.mxu0 %v949
    %982 = vmatprep.subr.bf16.mxu0 0
    %983 = vmatpush1.bf16.msra.mxu0 %v950
    %984 = vmatprep.subr.bf16.mxu0 0
    %985 = vmatpush1.bf16.msra.mxu0 %v951
    %986 = vmatprep.subr.bf16.mxu0 0
    %987 = vmatpush1.bf16.msra.mxu0 %v952
    %988 = vmatprep.subr.bf16.mxu0 0
    %989 = vmatpush1.bf16.msra.mxu0 %v953
    %990 = vmatprep.subr.bf16.mxu0 0
    %991 = vmatpush1.bf16.msra.mxu0 %v954
    %992 = vmatprep.subr.bf16.mxu0 0
    %993 = vmatpush1.bf16.msra.mxu0 %v955
    %994 = vmatprep.subr.bf16.mxu0 0
    %995 = vmatpush1.bf16.msra.mxu0 %v956
    %996 = vmatprep.mubr.bf16.mxu0 %v961
    %997 = vmatmul.mubr.bf16.gmra.mrb[0].mxu0 %v960
    %v998 = vpop.f32.mrb[0].mxu0
    %v999 = vadd.f32 0.0, %v998
    %v1000 = vpop.f32.mrb[0].mxu0
    %v1001 = vpop.f32.mrb[0].mxu0
    %v1002 = vpop.f32.mrb[0].mxu0
    %1003 = vdwg.mxu0
    %v1004 = vld [vmem:[%s1] sm:$0x1]
    %1006 = vset.pattern.permute.xlu0 5
    %1007 = vperm.xlu0 %1006, %v1004
    %v1008 = vpop.permute.xlu0 %1007
    %v1010 = vadd.f32 %v999, %v1008
    %v1011 = vsub.f32 0.0, %v1010
    %v1012 = vmul.f32 %v1011, 1.442695
    %v1013 = vpow.pop %v1012
    %v1014 = vadd.f32 %v1013, 1.0
    %v1015 = vrcp.pop %v1014
    %v1016 = vmul.f32 %v1015, %v19
    %v1017 = vsub.f32 1.0, %v1015
    %v1019 = vrot.slane %v19, 1
    %v1021 = vmul.f32 %v1017, %v1019
    %v1022 = vadd.f32 %v1016, %v1021
    %vm1023 = vcmask 57344
    %1024 = vst.msk [vmem:[#allocation2] sm:$0x1] %vm1023, %v1022
    // Predicated region
    $region18: #{tpu_custom_call.1} parent=1 // pred_check
      _
    $region19: #{tpu_custom_call.1} parent=1 // pred_check_branch
      %1026 = sbr.rel (0) target = $region21
    $region20: #{tpu_custom_call.1} parent=1 // pred_region
      %s1028 = ssub.s32 16, 16
      %1029 = vsyncadd [#allocation3], %s1028
      %s1031 = sshll.u32 [#allocation2], 4
      %s1032 = int_to_ptr.vmem [resolvable:$true] %s1031
      %1034 = dma.vmem_to_hbm [thread:$0]  %s1032, 16, %s4, [#allocation3]
    $region21: #{tpu_custom_call.1} parent=1 // pred_fallthru
      _
    // Predicated region
    $region22: #{tpu_custom_call.1} parent=1 // pred_check
      _
    $region23: #{tpu_custom_call.1} parent=1 // pred_check_branch
      %1036 = sbr.rel (0) target = $region25
    $region24: #{tpu_custom_call.1} parent=1 // pred_region
      %1037 = dma.done [#allocation3], 16
    $region25: #{tpu_custom_call.1} parent=1 // pred_fallthru
      _
    %1038 = vsyncpa [#allocation3], 1

</llo_original>
